<compile_context>
chip_gen: v7x
topology: tpu7x:2x2x1
jax: 0.10.0
libtpu: 0.0.40
codegen_flags: <defaults>
</compile_context>

<pallas_src>
import functools

import jax
import jax.numpy as jnp
from jax import lax
from jax.experimental import pallas as pl
from jax.experimental.pallas import tpu as pltpu

_LANES = 128
_TILE_ROWS = 2048              # 2048 x 128 f32 = 1 MiB per pipelined input block
_FUSED_REDUCE_MAX_ROWS = 4096  # mean/sum stay in a single fused program up to 4096 x 128 elems


def _to_slab(x):
    """(N,) -> (ceil(N/128), 128).  Free bitcast-reshape when N % 128 == 0."""
    n = int(x.shape[0])
    rows = max(pl.cdiv(n, _LANES), 1)
    padded = rows * _LANES
    if padded != n:
        # TODO(synk): lane-ragged batches pay one extra copy pass here (and a [:n] slice for
        # reduction='none'); feed N as a multiple of 128 to make the wrapper fully zero-copy.
        x = jnp.pad(x, (0, padded - n))
    return x.reshape(rows, _LANES)


# ----------------------------------------------------------------------------
# In-kernel helpers (traced inside the kernels).
# ----------------------------------------------------------------------------
def _ref_stats(r, l):
    """mu and 1/std (ddof=1) of the reference slab; zero padding corrected exactly."""
    mu = jnp.sum(r) * (1.0 / l)
    c = r - mu
    pad = r.size - l                                  # static
    css = jnp.sum(c * c) - pad * (mu * mu)            # centered two-pass: no cancellation
    inv_std = lax.rsqrt(css * (1.0 / (l - 1)))        # EUP rsqrt -> scalar multiply, no divides
    return mu, inv_std


def _loss_tile(yt, yp, mu, inv_std, margin):
    """Elementwise deviation loss on one tile (f32 math; upcast right after load)."""
    yp = yp.astype(jnp.float32)
    yt = yt.astype(jnp.float32)
    dev = (yp - mu) * inv_std
    inlier = jnp.abs(dev)
    outlier = jnp.maximum(margin - dev, 0.0)          # already >= 0 -> torch.abs() is redundant
    return inlier + yt * (outlier - inlier)           # == (1 - yt)*inlier + yt*outlier


def _masked_sum(loss, valid):
    """Sum of the first `valid` elements of the row-major-flattened tile (valid is static)."""
    rows, cols = loss.shape
    ridx = lax.broadcasted_iota(jnp.int32, (rows, cols), 0)
    cidx = lax.broadcasted_iota(jnp.int32, (rows, cols), 1)
    keep = (ridx * cols + cidx) < valid
    return jnp.sum(jnp.where(keep, loss, 0.0))


# ----------------------------------------------------------------------------
# Kernels.
# ----------------------------------------------------------------------------
def _loss_map_kernel(ref_ref, yt_ref, yp_ref, out_ref, *, margin, l):
    """reduction='none': one output tile per grid step."""
    mu, inv_std = _ref_stats(ref_ref[...], l)
    loss = _loss_tile(yt_ref[...], yp_ref[...], mu, inv_std, margin)
    out_ref[...] = loss.astype(out_ref.dtype)


def _reduce_fused_kernel(ref_ref, yt_ref, yp_ref, out_ref, *, margin, l, n, reduction):
    """mean/sum, small/medium N: single grid-less program, SMEM scalar output."""
    mu, inv_std = _ref_stats(ref_ref[...], l)
    loss = _loss_tile(yt_ref[...], yp_ref[...], mu, inv_std, margin)
    if n == loss.size:                                # lane-aligned: no mask work at all
        total = jnp.sum(loss)
    else:
        total = _masked_sum(loss, n)
    out_ref[0, 0] = total / n if reduction == "mean" else total


def _reduce_tiled_kernel(ref_ref, yt_ref, yp_ref, out_ref, *, margin, l, last_valid):
    """mean/sum, large N: per-tile partial sum replicated into an (8,128) output block.

    The wrapper divides the final jnp.sum of all blocks by 1024 (sum of 1024 equal copies is
    exact), so tiles are fully independent and the grid axis can be 'parallel' (v7x megacore).
    """
    mu, inv_std = _ref_stats(ref_ref[...], l)
    loss = _loss_tile(yt_ref[...], yp_ref[...], mu, inv_std, margin)

    out_ref[...] = jnp.broadcast_to(jnp.sum(loss), (8, _LANES))

    if last_valid is not None:                        # static: only emitted if the batch is ragged
        @pl.when(pl.program_id(0) == pl.num_programs(0) - 1)
        def _():                                      # re-mask only the final tile
            out_ref[...] = jnp.broadcast_to(_masked_sum(loss, last_valid), (8, _LANES))


# ----------------------------------------------------------------------------
# Dispatch wrappers.
# ----------------------------------------------------------------------------
def _dev_loss_none(ref2, yt2, yp2, n, l, margin, out_dtype):
    rows = yp2.shape[0]
    block_rows = min(_TILE_ROWS, rows)                # full-dim block for small batches
    grid = (pl.cdiv(rows, block_rows),)

    ref_spec = pl.BlockSpec(ref2.shape, lambda i: (0, 0))          # resident across the grid
    y_spec = pl.BlockSpec((block_rows, _LANES), lambda i: (i, 0))

    out = pl.pallas_call(
        functools.partial(_loss_map_kernel, margin=float(margin), l=l),
        grid=grid,
        out_shape=jax.ShapeDtypeStruct((rows, _LANES), out_dtype),
        in_specs=[ref_spec, y_spec, y_spec],
        out_specs=pl.BlockSpec((block_rows, _LANES), lambda i: (i, 0)),
        compiler_params=pltpu.CompilerParams(dimension_semantics=("parallel",)),
    )(ref2, yt2, yp2)

    flat = out.reshape(-1)                            # free bitcast
    return flat if flat.shape[0] == n else flat[:n]   # slice only for lane-ragged batches


def _dev_loss_reduce_fused(ref2, yt2, yp2, n, l, margin, reduction):
    out = pl.pallas_call(
        functools.partial(_reduce_fused_kernel, margin=float(margin), l=l, n=n,
                          reduction=reduction),
        out_shape=jax.ShapeDtypeStruct((1, 1), jnp.float32),
        in_specs=[pl.BlockSpec(memory_space=pltpu.MemorySpace.VMEM)] * 3,
        out_specs=pl.BlockSpec(memory_space=pltpu.MemorySpace.SMEM),
    )(ref2, yt2, yp2)
    return out[0, 0]


def _dev_loss_reduce_tiled(ref2, yt2, yp2, n, l, margin, reduction):
    rows = yp2.shape[0]
    block_rows = _TILE_ROWS                           # only reached when rows > _FUSED_REDUCE_MAX_ROWS
    grid_n = pl.cdiv(rows, block_rows)
    tile_elems = block_rows * _LANES

    last_valid = n - (grid_n - 1) * tile_elems        # static count of valid elems in the final tile
    if last_valid == tile_elems:
        last_valid = None                             # fully aligned: no tail mask anywhere

    ref_spec = pl.BlockSpec(ref2.shape, lambda i: (0, 0))
    y_spec = pl.BlockSpec((block_rows, _LANES), lambda i: (i, 0))

    partials = pl.pallas_call(
        functools.partial(_reduce_tiled_kernel, margin=float(margin), l=l, last_valid=last_valid),
        grid=(grid_n,),
        out_shape=jax.ShapeDtypeStruct((8 * grid_n, _LANES), jnp.float32),
        in_specs=[ref_spec, y_spec, y_spec],
        out_specs=pl.BlockSpec((8, _LANES), lambda i: (i, 0)),
        compiler_params=pltpu.CompilerParams(dimension_semantics=("parallel",)),
    )(ref2, yt2, yp2)

    total = jnp.sum(partials) * (1.0 / (8 * _LANES))  # each block holds 1024 copies of its partial
    return total / n if reduction == "mean" else total


# ----------------------------------------------------------------------------
# Public wrapper (DevLoss.forward equivalent).
# ----------------------------------------------------------------------------
def dev_loss(y_true, y_pred, ref, *, margin=5.0, reduction="mean"):
    """Pallas TPU implementation of DevLoss.forward.

    y_true:  shape (N,) labels (float32 / bfloat16 / int8 kept narrow in HBM; other dtypes cast).
    y_pred:  shape (N,) scores (float32 / bfloat16 kept as-is; other dtypes cast to float32).
    ref:     shape (L,) Gaussian reference sample (caller-supplied so torch.randn(l) randomness
             is deterministic / controlled).
    """
    if reduction not in ("mean", "sum", "none"):
        reduction = "none"
    n = int(y_pred.shape[0])
    l = int(ref.shape[0])

    # Narrow wire formats stay narrow in HBM; upcast happens inside the kernel after load.
    yp_wire = y_pred if y_pred.dtype in (jnp.float32, jnp.bfloat16) else y_pred.astype(jnp.float32)
    yt_wire = (y_true if y_true.dtype in (jnp.float32, jnp.bfloat16, jnp.int8)
               else y_true.astype(jnp.float32))

    ref2 = _to_slab(ref.astype(jnp.float32))          # tiny (l elements), pad cost negligible
    yt2 = _to_slab(yt_wire)
    yp2 = _to_slab(yp_wire)

    if reduction == "none":
        return _dev_loss_none(ref2, yt2, yp2, n, l, margin, yp_wire.dtype)

    if yp2.shape[0] <= _FUSED_REDUCE_MAX_ROWS:
        return _dev_loss_reduce_fused(ref2, yt2, yp2, n, l, margin, reduction)
    return _dev_loss_reduce_tiled(ref2, yt2, yp2, n, l, margin, reduction)


def _dev_loss_ref(y_true, y_pred, ref, *, margin=5.0, reduction="mean"):
    """Pure-JAX reference for correctness checking."""
    mu = jnp.mean(ref)
    std = jnp.std(ref, ddof=1)                        # torch.std is unbiased by default
    dev = (y_pred - mu) / std
    inlier = jnp.abs(dev)
    outlier = jnp.abs(jnp.maximum(margin - dev, 0.0))
    loss = (1.0 - y_true) * inlier + y_true * outlier
    if reduction == "mean":
        return jnp.mean(loss)
    if reduction == "sum":
        return jnp.sum(loss)
    return loss


if __name__ == "__main__":
    key = jax.random.PRNGKey(0)
    k_ref, k_pred, k_true = jax.random.split(key, 3)

    MARGIN = 5.0
    L = 5000                                           # module default reference-sample size
    ref = jax.random.normal(k_ref, (L,), dtype=jnp.float32)

    failures = []

    def check(y_true, y_pred, red, rtol=2e-4, atol=1e-4):
        out = jax.block_until_ready(dev_loss(y_true, y_pred, ref, margin=MARGIN, reduction=red))
        exp = _dev_loss_ref(y_true.astype(jnp.float32), y_pred.astype(jnp.float32), ref,
                            margin=MARGIN, reduction=red)
        if not bool(jnp.allclose(jnp.asarray(out, jnp.float32), exp, rtol=rtol, atol=atol)):
            failures.append((int(y_pred.shape[0]), str(y_pred.dtype), str(y_true.dtype), red))
            print(f"MISMATCH n={y_pred.shape[0]} yp={y_pred.dtype} yt={y_true.dtype} red={red}")

    def make(n, pred_dtype=jnp.float32, label_dtype=jnp.float32):
        yp = jax.random.normal(k_pred, (n,), dtype=jnp.float32).astype(pred_dtype)
        yt = (jax.random.uniform(k_true, (n,)) > 0.5).astype(label_dtype)
        return yt, yp

    # Small batch (module-typical): fused reduction path + single-tile 'none' path.
    yt, yp = make(64)
    for red in ("mean", "sum", "none"):
        check(yt, yp, red)

    # Tiny ragged batch (n % 128 != 0).
    yt, yp = make(8)
    for red in ("mean", "sum", "none"):
        check(yt, yp, red)

    # Large ragged batch: pipelined tiled path with a masked final tile.
    yt, yp = make(600_000)
    for red in ("mean", "sum", "none"):
        check(yt, yp, red)

    # Large lane-aligned batch: zero-copy reshape, no tail masking anywhere.
    yt, yp = make(1_048_576)
    for red in ("mean", "none"):
        check(yt, yp, red)

    # Narrow wire formats: bf16 y_pred/y_true (bf16 'none' output) and int8 labels.
    yt, yp = make(600_000, pred_dtype=jnp.bfloat16, label_dtype=jnp.bfloat16)
    check(yt, yp, "mean")
    check(yt, yp, "none", rtol=2e-2, atol=2e-2)
    yt_i8, yp_f = make(600_000, pred_dtype=jnp.float32, label_dtype=jnp.int8)
    check(yt_i8, yp_f, "mean")

    if not failures:
        print("KERNEL_OK")
</pallas_src>

<mosaic_0001>
module attributes {stable_mosaic.version = 11 : i64} {
  func.func @_reduce_fused_kernel(%arg0: memref<40x128xf32, #tpu.memory_space<vmem>>, %arg1: memref<1x128xf32, #tpu.memory_space<vmem>>, %arg2: memref<1x128xf32, #tpu.memory_space<vmem>>, %arg3: memref<1x1xf32, #tpu.memory_space<smem>>) attributes {dimension_semantics = [], scalar_prefetch = 0 : i64, scratch_operands = 0 : i64, tpu.core_type = #tpu.core_type<tc>} {
    %c0 = arith.constant 0 : index
    %c0_0 = arith.constant 0 : index
    %0 = vector.load %arg0[%c0, %c0_0] : memref<40x128xf32, #tpu.memory_space<vmem>>, vector<40x128xf32>
    %1 = vector.shape_cast %0 : vector<40x128xf32> to vector<1x40x128xf32>
    %cst = arith.constant dense<0.000000e+00> : vector<1xf32>
    %2 = vector.multi_reduction <add>, %1, %cst [1, 2] : vector<1x40x128xf32> to vector<1xf32>
    %3 = vector.shape_cast %2 : vector<1xf32> to vector<1x1x1xf32>
    %4 = vector.extract %3[0, 0, 0] : f32 from vector<1x1x1xf32>
    %cst_1 = arith.constant 2.000000e-04 : f32
    %5 = arith.mulf %4, %cst_1 : f32
    %6 = vector.broadcast %5 : f32 to vector<40x128xf32>
    %7 = arith.subf %0, %6 : vector<40x128xf32>
    %8 = arith.mulf %7, %7 : vector<40x128xf32>
    %9 = vector.shape_cast %8 : vector<40x128xf32> to vector<1x40x128xf32>
    %cst_2 = arith.constant dense<0.000000e+00> : vector<1xf32>
    %10 = vector.multi_reduction <add>, %9, %cst_2 [1, 2] : vector<1x40x128xf32> to vector<1xf32>
    %11 = vector.shape_cast %10 : vector<1xf32> to vector<1x1x1xf32>
    %12 = vector.extract %11[0, 0, 0] : f32 from vector<1x1x1xf32>
    %13 = arith.mulf %5, %5 : f32
    %cst_3 = arith.constant 1.200000e+02 : f32
    %14 = arith.mulf %cst_3, %13 : f32
    %15 = arith.subf %12, %14 : f32
    %cst_4 = arith.constant 2.00040013E-4 : f32
    %16 = arith.mulf %15, %cst_4 : f32
    %17 = math.rsqrt %16 : f32
    %c0_5 = arith.constant 0 : index
    %c0_6 = arith.constant 0 : index
    %18 = vector.load %arg1[%c0_5, %c0_6] : memref<1x128xf32, #tpu.memory_space<vmem>>, vector<1x128xf32>
    %c0_7 = arith.constant 0 : index
    %c0_8 = arith.constant 0 : index
    %19 = vector.load %arg2[%c0_7, %c0_8] : memref<1x128xf32, #tpu.memory_space<vmem>>, vector<1x128xf32>
    %20 = vector.broadcast %5 : f32 to vector<1x128xf32>
    %21 = arith.subf %19, %20 : vector<1x128xf32>
    %22 = vector.broadcast %17 : f32 to vector<1x128xf32>
    %23 = arith.mulf %21, %22 : vector<1x128xf32>
    %24 = math.absf %23 : vector<1x128xf32>
    %cst_9 = arith.constant 5.000000e+00 : f32
    %25 = vector.broadcast %cst_9 : f32 to vector<1x128xf32>
    %26 = arith.subf %25, %23 : vector<1x128xf32>
    %cst_10 = arith.constant 0.000000e+00 : f32
    %27 = vector.broadcast %cst_10 : f32 to vector<1x128xf32>
    %28 = arith.maximumf %26, %27 : vector<1x128xf32>
    %29 = arith.subf %28, %24 : vector<1x128xf32>
    %30 = arith.mulf %18, %29 : vector<1x128xf32>
    %31 = arith.addf %24, %30 : vector<1x128xf32>
    %32 = tpu.iota {dimensions = array<i32: 0>} : vector<1x128xi32>
    %33 = tpu.iota {dimensions = array<i32: 1>} : vector<1x128xi32>
    %c128_i32 = arith.constant 128 : i32
    %34 = vector.broadcast %c128_i32 : i32 to vector<1x128xi32>
    %35 = arith.muli %32, %34 : vector<1x128xi32>
    %36 = arith.addi %35, %33 : vector<1x128xi32>
    %c64_i32 = arith.constant 64 : i32
    %37 = vector.broadcast %c64_i32 : i32 to vector<1x128xi32>
    %38 = arith.cmpi slt, %36, %37 : vector<1x128xi32>
    %cst_11 = arith.constant 0.000000e+00 : f32
    %39 = vector.broadcast %cst_11 : f32 to vector<1x128xf32>
    %40 = arith.select %38, %31, %39 : vector<1x128xi1>, vector<1x128xf32>
    %41 = vector.shape_cast %40 : vector<1x128xf32> to vector<1x1x128xf32>
    %cst_12 = arith.constant dense<0.000000e+00> : vector<1xf32>
    %42 = vector.multi_reduction <add>, %41, %cst_12 [1, 2] : vector<1x1x128xf32> to vector<1xf32>
    %43 = vector.shape_cast %42 : vector<1xf32> to vector<1x1x1xf32>
    %44 = vector.extract %43[0, 0, 0] : f32 from vector<1x1x1xf32>
    %cst_13 = arith.constant 6.400000e+01 : f32
    %45 = arith.divf %44, %cst_13 : f32
    %c0_14 = arith.constant 0 : index
    %c0_15 = arith.constant 0 : index
    %46 = memref.load %arg3[%c0_14, %c0_15] : memref<1x1xf32, #tpu.memory_space<smem>>
    memref.store %45, %arg3[%c0_14, %c0_15] : memref<1x1xf32, #tpu.memory_space<smem>>
    return
  }
}

</mosaic_0001>

<llo_original>
// kernel: tpu_custom_call.1
$region0: #{tpu_custom_call.1}
  #allocation0 [shape = 'u32[]', space=smem, size = 0x4, offset = 0x4, fixed_abs, tag = 'smem constant byte address 0x4 - core index']
  #allocation1 [shape = 'u32[144,128]{1,0:T(1,128)}', space=vmem, size = 0x12000, scoped, tag = 'internal scratch']
  %s0 = inlined_call_operand.hbm [shape: f32[40,128], index: 0, kind: input, shape index: {}]
  %s1 = inlined_call_operand.vmem [shape: f32[1,128], index: 1, kind: input, shape index: {}]
  %s2 = inlined_call_operand.vmem [shape: f32[1,128], index: 2, kind: input, shape index: {}]
  %s3 = inlined_call_operand.hbm [shape: f32[1,1], index: 3, kind: output, shape index: {}]
  %s4 = sld [smem:[#allocation0]]
  $region26: #{tpu_custom_call.1} parent=0
    _
  %s6 = ssub.s32 1, %s4
  %s7 = scalar_select 0, %s6, %s4
  $region1: #{tpu_custom_call.1} parent=0
    #allocation2 [shape = 'u8[20480]{0}', space=vmem, size = 0x5000, scoped, tag = 'input window, operand 0, single buffered']
    #allocation3 [shape = 's32[1]{0}', space=sflag, size = 0x4, scoped, tag = 'scoped memory for tpu_custom_call.1']
    #allocation4 [shape = 's32[1]{0}', space=sflag, size = 0x4, scoped, tag = 'scoped memory for tpu_custom_call.1']
    #allocation5 [shape = 'u8[512]{0}', space=smem, size = 0x200, scoped, tag = 'output window, operand 0, single buffered']
    %8 = vsyncpa [#allocation3], 0
    %9 = vsyncpa [#allocation4], 0
    // Predicated region
    $region2: #{tpu_custom_call.1} parent=1 // pred_check
      _
    $region3: #{tpu_custom_call.1} parent=1 // pred_check_branch
      %11 = sbr.rel (0) target = $region5
    $region4: #{tpu_custom_call.1} parent=1 // pred_region
      %s13 = ssub.s32 640, 640
      %14 = vsyncadd [#allocation3], %s13
      %s15 = sshll.u32 [#allocation2], 4
      %s16 = int_to_ptr.vmem [resolvable:$true] %s15
      %21 = dma.hbm_to_vmem [thread:$0]  %s0, 640, %s16, [#allocation3], 128, 128, 8
    $region5: #{tpu_custom_call.1} parent=1 // pred_fallthru
      _
    // Predicated region
    $region6: #{tpu_custom_call.1} parent=1 // pred_check
      _
    $region7: #{tpu_custom_call.1} parent=1 // pred_check_branch
      %23 = sbr.rel (0) target = $region9
    $region8: #{tpu_custom_call.1} parent=1 // pred_region
      _
    $region9: #{tpu_custom_call.1} parent=1 // pred_fallthru
      _
    // Predicated region
    $region10: #{tpu_custom_call.1} parent=1 // pred_check
      _
    $region11: #{tpu_custom_call.1} parent=1 // pred_check_branch
      %25 = sbr.rel (0) target = $region13
    $region12: #{tpu_custom_call.1} parent=1 // pred_region
      _
    $region13: #{tpu_custom_call.1} parent=1 // pred_fallthru
      _
    // Predicated region
    $region14: #{tpu_custom_call.1} parent=1 // pred_check
      _
    $region15: #{tpu_custom_call.1} parent=1 // pred_check_branch
      %27 = sbr.rel (0) target = $region17
    $region16: #{tpu_custom_call.1} parent=1 // pred_region
      %28 = dma.done [#allocation3], 640
    $region17: #{tpu_custom_call.1} parent=1 // pred_fallthru
      _
    %v29 = vld [vmem:[#allocation2] sm:$0xff]
    %v30 = vld [vmem:[#allocation2 + $0x8] sm:$0xff]
    %v31 = vld [vmem:[#allocation2 + $0x10] sm:$0xff]
    %v32 = vld [vmem:[#allocation2 + $0x18] sm:$0xff]
    %v33 = vld [vmem:[#allocation2 + $0x20] sm:$0xff]
    %v34 = vadd.f32 %v29, %v30
    %v35 = vadd.f32 %v34, %v31
    %v36 = vadd.f32 %v35, %v32
    %v37 = vadd.f32 %v36, %v33
    %38 = vadd.xlane.f32.xlu0 %v37
    %v39 = vpop.xlane.xlu0 %38
    %v40 = vrot.slane %v39, 4
    %v41 = vadd.f32 %v39, %v40
    %v42 = vrot.slane %v41, 2
    %v43 = vadd.f32 %v41, %v42
    %v44 = vrot.slane %v43, 1
    %v45 = vadd.f32 %v43, %v44
    %s46 = vtos %v45
    %s47 = smul.f32 %s46, 0.0002
    %v48 = vstv %s47
    %v49 = vsub.f32 %v29, %v48
    %v50 = vsub.f32 %v30, %v48
    %v51 = vsub.f32 %v31, %v48
    %v52 = vsub.f32 %v32, %v48
    %v53 = vsub.f32 %v33, %v48
    %v54 = vmul.f32 %v49, %v49
    %v55 = vmul.f32 %v50, %v50
    %v56 = vmul.f32 %v51, %v51
    %v57 = vmul.f32 %v52, %v52
    %v58 = vmul.f32 %v53, %v53
    %v59 = vadd.f32 %v54, %v55
    %v60 = vadd.f32 %v59, %v56
    %v61 = vadd.f32 %v60, %v57
    %v62 = vadd.f32 %v61, %v58
    %63 = vadd.xlane.f32.xlu0 %v62
    %v64 = vpop.xlane.xlu0 %63
    %v65 = vrot.slane %v64, 4
    %v66 = vadd.f32 %v64, %v65
    %v67 = vrot.slane %v66, 2
    %v68 = vadd.f32 %v66, %v67
    %v69 = vrot.slane %v68, 1
    %v70 = vadd.f32 %v68, %v69
    %s71 = vtos %v70
    %s72 = smul.f32 %s47, %s47
    %s73 = smul.f32 %s72, 120.0
    %s74 = ssub.f32 %s71, %s73
    %s75 = smul.f32 %s74, 0.00020004001
    %v76 = vstv %s75
    %v77 = vrsqrt.pop %v76
    %s78 = vtos %v77
    %v79 = vld [vmem:[%s1] sm:$0x1]
    %v80 = vld [vmem:[%s2] sm:$0x1]
    %v81 = vsub.f32 %v80, %v48
    %v82 = vstv %s78
    %v83 = vmul.f32 %v81, %v82
    %v84 = vand.u32 2147483647, %v83
    %v85 = vsub.f32 5.0, %v83
    %v86 = vmax.f32 %v85, 0.0
    %v87 = vsub.f32 %v86, %v84
    %v88 = vmul.f32 %v79, %v87
    %v89 = vadd.f32 %v84, %v88
    %v90 = vlaneseq
    %v91 = vshrl.u32 %v90, 7
    %v92 = vlaneseq
    %v93 = vand.u32 %v92, 127
    %v94 = vmul.u32 %v91, 128
    %v95 = vadd.s32 %v94, %v93
    %vm96 = vcmp.lt.s32.totalorder %v95, 64
    %v97 = vsel %vm96, %v89, 0.0
    %vm98 = vcmask 1040384
    %v99 = vsel %vm98, %v97, 0.0
    %100 = vadd.xlane.f32.xlu0 %v99
    %v101 = vpop.xlane.xlu0 %100
    %v102 = vrot.slane %v101, 4
    %v103 = vadd.f32 %v101, %v102
    %v104 = vrot.slane %v103, 2
    %v105 = vadd.f32 %v103, %v104
    %v106 = vrot.slane %v105, 1
    %v107 = vadd.f32 %v105, %v106
    %s108 = vtos %v107
    %v109 = vrcp.pop 64.0
    %s110 = vtos %v109
    %s111 = smul.f32 %s108, %s110
    %s112 = scalar_lea.smem [#allocation5], 0
    %113 = sst [smem:[%s112]] %s111
    // Predicated region
    $region18: #{tpu_custom_call.1} parent=1 // pred_check
      _
    $region19: #{tpu_custom_call.1} parent=1 // pred_check_branch
      %115 = sbr.rel (0) target = $region21
    $region20: #{tpu_custom_call.1} parent=1 // pred_region
      %s117 = ssub.s32 16, 16
      %118 = vsyncadd [#allocation4], %s117
      %121 = dma.smem_to_hbm [#allocation5], 16, %s3, [#allocation4]
    $region21: #{tpu_custom_call.1} parent=1 // pred_fallthru
      _
    // Predicated region
    $region22: #{tpu_custom_call.1} parent=1 // pred_check
      _
    $region23: #{tpu_custom_call.1} parent=1 // pred_check_branch
      %123 = sbr.rel (0) target = $region25
    $region24: #{tpu_custom_call.1} parent=1 // pred_region
      %124 = dma.done [#allocation4], 16
    $region25: #{tpu_custom_call.1} parent=1 // pred_fallthru
      _
    %125 = sfence
    %126 = vsyncpa [#allocation3], 1
    %127 = vsyncpa [#allocation4], 1

</llo_original>
